<compile_context>
chip_gen: v7x
topology: tpu7x:2x2x1
jax: 0.10.0
libtpu: 0.0.40
codegen_flags: <defaults>
</compile_context>

<pallas_src>
import functools

import jax
import jax.numpy as jnp
from jax.experimental import pallas as pl
from jax.experimental.pallas import tpu as pltpu


def _gcn_kernel(lam_ref, hx_ref, hxt_ref, v_ref, a_in_ref, out_ref, a_out_ref,
                *, n_valid):
    """One row tile of the attention + aggregation.

    lam_ref  : (1,)  f32  SMEM   lambda
    hx_ref   : (tm, 128)         query rows of Hn@W0+b0        (matmul dtype)
    hxt_ref  : (128, Np)         (Hn@W0+b0)^T, all keys        (matmul dtype)
    v_ref    : (Np, cout)        Hn@W1+b1                      (matmul dtype)
    a_in_ref : (tm, Np)  f32     adjacency row tile
    out_ref  : (tm, cout) f32
    a_out_ref: (tm, Np)  f32
    """
    i = pl.program_id(0)
    tm, n_pad = a_out_ref.shape

    # e = q @ k^T ; k^T was pre-transposed in the wrapper -> plain MXU matmul.
    e = jnp.dot(hx_ref[...], hxt_ref[...], preferred_element_type=jnp.float32)

    cols = jax.lax.broadcasted_iota(jnp.int32, (1, n_pad), 1)
    if n_valid < n_pad:                       # static: padded key columns exist
        e = jnp.where(cols < n_valid, e, -jnp.inf)

    # Row softmax (the full row lives in this tile).  Per-row reciprocal on the
    # (tm,1) sums instead of a (tm,N) divide.
    m = jnp.max(e, axis=1, keepdims=True)
    p = jnp.exp(e - m)
    inv = pl.reciprocal(jnp.sum(p, axis=1, keepdims=True), approx=False)
    e_sm = p * inv

    # A = softmax(e) * A_in + lambda * I  (diagonal via iota broadcast-compare).
    rows = jax.lax.broadcasted_iota(jnp.int32, (tm, 1), 0) + i * tm
    a_vals = e_sm * a_in_ref[...]
    a_out_ref[...] = jnp.where(rows == cols, a_vals + lam_ref[0], a_vals)

    # out = LeakyReLU(softmax(e) @ V), negative_slope = 0.01.
    o = jnp.dot(e_sm.astype(v_ref.dtype), v_ref[...],
                preferred_element_type=jnp.float32)
    out_ref[...] = jnp.where(o > 0, o, 0.01 * o)


def _vmem_bytes(tm, n_pad, hid0, cout, mm_bytes):
    """Rough per-step VMEM footprint: double-buffered streams + residents + temps."""
    stream = 2 * (tm * hid0 * mm_bytes        # hx row tile
                  + tm * n_pad * 4            # A_in row tile
                  + tm * n_pad * 4            # A_out row tile
                  + tm * cout * 4)            # out row tile
    resident = 2 * (hid0 * n_pad + n_pad * cout) * mm_bytes    # hx^T, V
    temps = 4 * tm * n_pad * 4                # e, p, e_sm, a_vals (f32)
    return stream + resident + temps


def _pick_tiling(n, hid0, cout, budget_bytes=48 << 20):
    """Row tile size tm (multiple of 128) and padded node count Np."""
    n_pad = -(-n // 128) * 128
    for t in (512, 384, 256, 128):
        if n_pad % t == 0 and _vmem_bytes(t, n_pad, hid0, cout, 4) <= budget_bytes:
            return t, n_pad
    # TODO(synk): for graphs where even tm=128 rows of (tm, N) temporaries
    # overflow VMEM (notably v7x's 64 MiB), restructure as an online softmax
    # over key-column tiles instead of holding full rows.
    return 128, n_pad


def mygcn_forward(H, params, a_in, *, tm=None, bn_eps=1e-5,
                  matmul_dtype=jnp.bfloat16):
    """H: (N, input_dim) node features, a_in: (N, N) adjacency. Returns (out, A)."""
    N, D = H.shape
    w0, b0, w1, b1, gamma, beta, lam = params
    hid0 = w0.shape[1]
    cout = w1.shape[1]
    assert a_in.shape == (N, N)

    # ---- Hoisted once per call (plain XLA): BN affine + both projections. ----
    H = H.astype(jnp.float32)
    mean = jnp.mean(H, axis=0, keepdims=True)
    var = jnp.mean((H - mean) ** 2, axis=0, keepdims=True)     # biased, like torch BN
    inv_std = 1.0 / jnp.sqrt(var + bn_eps)
    hn = (H - mean) * (gamma.reshape(1, D) * inv_std) + beta.reshape(1, D)
    hx = hn @ w0 + b0                                          # (N, 128)
    v = hn @ w1 + b1                                           # (N, cout)

    # ---- Tiling / padding (lane-dense, tm multiple of 128). ----
    if tm is None:
        tm, n_pad = _pick_tiling(N, hid0, cout)
    else:
        assert N % tm == 0, "explicit tm must divide N"
        n_pad = N

    a_in = a_in.astype(jnp.float32)
    if n_pad != N:
        pad = n_pad - N
        hx = jnp.pad(hx, ((0, pad), (0, 0)))
        v = jnp.pad(v, ((0, pad), (0, 0)))
        a_in = jnp.pad(a_in, ((0, pad), (0, pad)))

    hx_mm = hx.astype(matmul_dtype)
    hxt_mm = hx_mm.T                   # transposed ONCE here, not per grid step
    v_mm = v.astype(matmul_dtype)
    lam_s = jnp.reshape(lam, (1,)).astype(jnp.float32)

    mm_bytes = jnp.dtype(matmul_dtype).itemsize
    est = _vmem_bytes(tm, n_pad, hid0, cout, mm_bytes)
    vmem_limit = int(min(max(32 << 20, 1.3 * est), 100 << 20))

    grid = (n_pad // tm,)
    cost = pl.CostEstimate(
        flops=int(2 * n_pad * n_pad * (hid0 + cout) + 8 * n_pad * n_pad),
        transcendentals=int(n_pad * n_pad),
        bytes_accessed=int(4 * 2 * n_pad * n_pad
                           + mm_bytes * (2 * n_pad * hid0 + n_pad * cout)
                           + 4 * n_pad * cout))

    kernel = functools.partial(_gcn_kernel, n_valid=N)

    out, A = pl.pallas_call(
        kernel,
        out_shape=(jax.ShapeDtypeStruct((n_pad, cout), jnp.float32),
                   jax.ShapeDtypeStruct((n_pad, n_pad), jnp.float32)),
        grid_spec=pltpu.PrefetchScalarGridSpec(
            num_scalar_prefetch=0,
            grid=grid,
            in_specs=[
                pl.BlockSpec(memory_space=pltpu.MemorySpace.SMEM),   # lambda (scalar)
                pl.BlockSpec((tm, hid0), lambda i: (i, 0)),          # hx row tile (queries)
                pl.BlockSpec((hid0, n_pad), lambda i: (0, 0)),       # hx^T (all keys, resident)
                pl.BlockSpec((n_pad, cout), lambda i: (0, 0)),       # V (resident)
                pl.BlockSpec((tm, n_pad), lambda i: (i, 0)),         # A_in row tile
            ],
            out_specs=(pl.BlockSpec((tm, cout), lambda i: (i, 0)),   # out row tile
                       pl.BlockSpec((tm, n_pad), lambda i: (i, 0))),  # A row tile
        ),
        compiler_params=pltpu.CompilerParams(
            dimension_semantics=("parallel",),
            vmem_limit_bytes=vmem_limit),
        cost_estimate=cost,
    )(lam_s, hx_mm, hxt_mm, v_mm, a_in)

    if n_pad != N:
        out = out[:N]
        A = A[:N, :N]
    return out, A


def init_params(key, input_dim, output_dim, hidden0=128):
    """Linear weights stored pre-transposed (in, out) for x @ W."""
    k0, k1, k2, k3, k4, k5 = jax.random.split(key, 6)
    bound = 1.0 / jnp.sqrt(input_dim)
    w0 = jax.random.uniform(k0, (input_dim, hidden0), jnp.float32, -bound, bound)
    b0 = jax.random.uniform(k1, (1, hidden0), jnp.float32, -bound, bound)
    w1 = jax.random.uniform(k2, (input_dim, output_dim), jnp.float32, -bound, bound)
    b1 = jax.random.uniform(k3, (1, output_dim), jnp.float32, -bound, bound)
    gamma = jax.random.uniform(k4, (input_dim,), jnp.float32, 0.5, 1.5)
    beta = 0.1 * jax.random.normal(k5, (input_dim,), jnp.float32)
    lam = jnp.float32(0.3)   # nonzero to exercise the + lambda * I path
    return w0, b0, w1, b1, gamma, beta, lam


def mygcn_reference(H, params, a_in, bn_eps=1e-5):
    """Pure-JAX mirror of the PyTorch forward (sanity check)."""
    w0, b0, w1, b1, gamma, beta, lam = params
    N, D = H.shape
    mean = jnp.mean(H, axis=0, keepdims=True)
    var = jnp.mean((H - mean) ** 2, axis=0, keepdims=True)
    hn = (H - mean) / jnp.sqrt(var + bn_eps) * gamma.reshape(1, D) + beta.reshape(1, D)
    hx = hn @ w0 + b0
    e = hx @ hx.T
    e_sm = jax.nn.softmax(e, axis=1)
    A = e_sm * a_in + lam * jnp.eye(N, dtype=jnp.float32)
    o = e_sm @ (hn @ w1 + b1)
    out = jnp.where(o > 0, o, 0.01 * o)
    return out, A


if __name__ == "__main__":
    N, input_dim, output_dim = 128, 16, 32

    key = jax.random.PRNGKey(0)
    kH, kA, kp = jax.random.split(key, 3)
    H = jax.random.normal(kH, (N, input_dim), jnp.float32)
    A_in = (jax.random.uniform(kA, (N, N)) < 0.1).astype(jnp.float32)
    params = init_params(kp, input_dim, output_dim)

    out_ref, A_ref = mygcn_reference(H, params, A_in)

    # f32 MXU path: tight check against the pure-JAX reference.
    out32, A32 = mygcn_forward(H, params, A_in, matmul_dtype=jnp.float32)
    out32 = jax.block_until_ready(out32)
    A32 = jax.block_until_ready(A32)
    assert out32.shape == (N, output_dim) and A32.shape == (N, N)
    assert jnp.allclose(out32, out_ref, atol=1e-4, rtol=1e-4)
    assert jnp.allclose(A32, A_ref, atol=1e-4, rtol=1e-4)

    # Default bf16-operand MXU path (the fast path on v6e/v7x): looser
    # tolerance because the attention logits / aggregation inputs are bf16.
    out16, A16 = mygcn_forward(H, params, A_in)
    out16 = jax.block_until_ready(out16)
    A16 = jax.block_until_ready(A16)
    assert out16.shape == (N, output_dim) and A16.shape == (N, N)
    assert jnp.allclose(out16, out_ref, atol=5e-2, rtol=5e-2)
    assert jnp.allclose(A16, A_ref, atol=5e-2, rtol=5e-2)

    # Ragged graph (N not a multiple of 128) exercises the pad + column-mask path.
    N2 = 70
    H2 = jax.random.normal(jax.random.PRNGKey(1), (N2, input_dim), jnp.float32)
    A2_in = (jax.random.uniform(jax.random.PRNGKey(2), (N2, N2)) < 0.2).astype(jnp.float32)
    out2, A2 = mygcn_forward(H2, params, A2_in, matmul_dtype=jnp.float32)
    out2 = jax.block_until_ready(out2)
    A2 = jax.block_until_ready(A2)
    out2_ref, A2_ref = mygcn_reference(H2, params, A2_in)
    assert out2.shape == (N2, output_dim) and A2.shape == (N2, N2)
    assert jnp.allclose(out2, out2_ref, atol=1e-4, rtol=1e-4)
    assert jnp.allclose(A2, A2_ref, atol=1e-4, rtol=1e-4)

    print("KERNEL_OK")
</pallas_src>

<mosaic_0001>
module attributes {stable_mosaic.version = 11 : i64} {
  func.func @_gcn_kernel(%arg0: i32, %arg1: memref<1xf32, #tpu.memory_space<smem>>, %arg2: memref<128x128xf32, #tpu.memory_space<vmem>>, %arg3: memref<128x128xf32, #tpu.memory_space<vmem>>, %arg4: memref<128x32xf32, #tpu.memory_space<vmem>>, %arg5: memref<128x128xf32, #tpu.memory_space<vmem>>, %arg6: memref<128x32xf32, #tpu.memory_space<vmem>>, %arg7: memref<128x128xf32, #tpu.memory_space<vmem>>) attributes {dimension_semantics = [#tpu.dimension_semantics<parallel>], iteration_bounds = array<i64: 1>, scalar_prefetch = 0 : i64, scratch_operands = 0 : i64, tpu.core_type = #tpu.core_type<tc>, window_params = [{transform_indices = @transform_0, window_bounds = array<i64: 1>}, {transform_indices = @transform_1, window_bounds = array<i64: 128, 128>}, {pipeline_mode = #tpu.pipeline_mode<synchronous>, transform_indices = @transform_2, window_bounds = array<i64: 128, 128>}, {pipeline_mode = #tpu.pipeline_mode<synchronous>, transform_indices = @transform_3, window_bounds = array<i64: 128, 32>}, {transform_indices = @transform_4, window_bounds = array<i64: 128, 128>}, {transform_indices = @transform_5, window_bounds = array<i64: 128, 32>}, {transform_indices = @transform_6, window_bounds = array<i64: 128, 128>}]} {
    %c0 = arith.constant 0 : index
    %c0_0 = arith.constant 0 : index
    %0 = vector.load %arg2[%c0, %c0_0] : memref<128x128xf32, #tpu.memory_space<vmem>>, vector<128x128xf32>
    %c0_1 = arith.constant 0 : index
    %c0_2 = arith.constant 0 : index
    %1 = vector.load %arg3[%c0_1, %c0_2] : memref<128x128xf32, #tpu.memory_space<vmem>>, vector<128x128xf32>
    %cst = arith.constant dense<0.000000e+00> : vector<128x128xf32>
    %2 = tpu.matmul %0, %1, %cst {dimension_numbers = #tpu.dot_dimension_numbers<[1], [0], [0], [1], [0, 0, 1, 1], [], []>} : vector<128x128xf32>, vector<128x128xf32>, vector<128x128xf32> -> vector<128x128xf32>
    %3 = tpu.iota {dimensions = array<i32: 1>} : vector<1x128xi32>
    %cst_3 = arith.constant dense<0xFF800000> : vector<128xf32>
    %4 = vector.multi_reduction <maximumf>, %2, %cst_3 [1] : vector<128x128xf32> to vector<128xf32>
    %5 = vector.shape_cast %4 : vector<128xf32> to vector<128x1xf32>
    %6 = vector.broadcast %5 : vector<128x1xf32> to vector<128x128xf32>
    %7 = arith.subf %2, %6 : vector<128x128xf32>
    %8 = math.exp %7 : vector<128x128xf32>
    %cst_4 = arith.constant dense<0.000000e+00> : vector<128xf32>
    %9 = vector.multi_reduction <add>, %8, %cst_4 [1] : vector<128x128xf32> to vector<128xf32>
    %10 = vector.shape_cast %9 : vector<128xf32> to vector<128x1xf32>
    %11 = tpu.reciprocal %10 : vector<128x1xf32> -> vector<128x1xf32>
    %12 = vector.broadcast %11 : vector<128x1xf32> to vector<128x128xf32>
    %13 = arith.mulf %8, %12 : vector<128x128xf32>
    %14 = tpu.iota {dimensions = array<i32: 0>} : vector<128x1xi32>
    %c128_i32 = arith.constant 128 : i32
    %15 = arith.muli %arg0, %c128_i32 : i32
    %16 = vector.broadcast %15 : i32 to vector<128x1xi32>
    %17 = arith.addi %14, %16 : vector<128x1xi32>
    %c0_5 = arith.constant 0 : index
    %c0_6 = arith.constant 0 : index
    %18 = vector.load %arg5[%c0_5, %c0_6] : memref<128x128xf32, #tpu.memory_space<vmem>>, vector<128x128xf32>
    %19 = arith.mulf %13, %18 : vector<128x128xf32>
    %20 = vector.broadcast %17 : vector<128x1xi32> to vector<128x128xi32>
    %21 = vector.broadcast %3 : vector<1x128xi32> to vector<128x128xi32>
    %22 = arith.cmpi eq, %20, %21 : vector<128x128xi32>
    %c0_7 = arith.constant 0 : index
    %23 = memref.load %arg1[%c0_7] : memref<1xf32, #tpu.memory_space<smem>>
    %24 = vector.broadcast %23 : f32 to vector<128x128xf32>
    %25 = arith.addf %19, %24 : vector<128x128xf32>
    %26 = arith.select %22, %25, %19 : vector<128x128xi1>, vector<128x128xf32>
    %c0_8 = arith.constant 0 : index
    %c0_9 = arith.constant 0 : index
    %27 = vector.load %arg7[%c0_8, %c0_9] : memref<128x128xf32, #tpu.memory_space<vmem>>, vector<128x128xf32>
    tpu.vector_store %arg7[%c0_8, %c0_9], %26 {strides = array<i32>} : memref<128x128xf32, #tpu.memory_space<vmem>>, vector<128x128xf32>,
    %c0_10 = arith.constant 0 : index
    %c0_11 = arith.constant 0 : index
    %28 = vector.load %arg4[%c0_10, %c0_11] : memref<128x32xf32, #tpu.memory_space<vmem>>, vector<128x32xf32>
    %cst_12 = arith.constant dense<0.000000e+00> : vector<128x32xf32>
    %29 = tpu.matmul %13, %28, %cst_12 {dimension_numbers = #tpu.dot_dimension_numbers<[1], [0], [0], [1], [0, 0, 1, 1], [], []>} : vector<128x128xf32>, vector<128x32xf32>, vector<128x32xf32> -> vector<128x32xf32>
    %cst_13 = arith.constant 0.000000e+00 : f32
    %30 = vector.broadcast %cst_13 : f32 to vector<128x32xf32>
    %31 = arith.cmpf ogt, %29, %30 : vector<128x32xf32>
    %cst_14 = arith.constant 0.00999999977 : f32
    %32 = vector.broadcast %cst_14 : f32 to vector<128x32xf32>
    %33 = arith.mulf %32, %29 : vector<128x32xf32>
    %34 = arith.select %31, %29, %33 : vector<128x32xi1>, vector<128x32xf32>
    %c0_15 = arith.constant 0 : index
    %c0_16 = arith.constant 0 : index
    %35 = vector.load %arg6[%c0_15, %c0_16] : memref<128x32xf32, #tpu.memory_space<vmem>>, vector<128x32xf32>
    tpu.vector_store %arg6[%c0_15, %c0_16], %34 {strides = array<i32>} : memref<128x32xf32, #tpu.memory_space<vmem>>, vector<128x32xf32>,
    return
  }
  func.func @transform_0(%arg0: i32) -> i32 {
    %c0_i32 = arith.constant 0 : i32
    %c0_i32_0 = arith.constant 0 : i32
    return %c0_i32 : i32
  }
  func.func @transform_1(%arg0: i32) -> (i32, i32) {
    %c0_i32 = arith.constant 0 : i32
    %c0_i32_0 = arith.constant 0 : i32
    return %arg0, %c0_i32 : i32, i32
  }
  func.func @transform_2(%arg0: i32) -> (i32, i32) {
    %c0_i32 = arith.constant 0 : i32
    %c0_i32_0 = arith.constant 0 : i32
    %c0_i32_1 = arith.constant 0 : i32
    return %c0_i32, %c0_i32_0 : i32, i32
  }
  func.func @transform_3(%arg0: i32) -> (i32, i32) {
    %c0_i32 = arith.constant 0 : i32
    %c0_i32_0 = arith.constant 0 : i32
    %c0_i32_1 = arith.constant 0 : i32
    return %c0_i32, %c0_i32_0 : i32, i32
  }
  func.func @transform_4(%arg0: i32) -> (i32, i32) {
    %c0_i32 = arith.constant 0 : i32
    %c0_i32_0 = arith.constant 0 : i32
    return %arg0, %c0_i32 : i32, i32
  }
  func.func @transform_5(%arg0: i32) -> (i32, i32) {
    %c0_i32 = arith.constant 0 : i32
    %c0_i32_0 = arith.constant 0 : i32
    return %arg0, %c0_i32 : i32, i32
  }
  func.func @transform_6(%arg0: i32) -> (i32, i32) {
    %c0_i32 = arith.constant 0 : i32
    %c0_i32_0 = arith.constant 0 : i32
    return %arg0, %c0_i32 : i32, i32
  }
}

</mosaic_0001>

<llo_original>
// kernel: tpu_custom_call.1
$region0: #{tpu_custom_call.1}
  #allocation0 [shape = 'u32[]', space=smem, size = 0x4, offset = 0x4, fixed_abs, tag = 'smem constant byte address 0x4 - core index']
  #allocation1 [shape = 'u32[144,128]{1,0:T(1,128)}', space=vmem, size = 0x12000, scoped, tag = 'internal scratch']
  #allocation2 [shape = 'f32[1]{0:T(128)S(6)}', space=smem, size = 0x200, scoped, tag = 'scoped memory for tpu_custom_call.1']
  %s0 = inlined_call_operand.<no memory space> [shape: f32[1], index: 0, kind: input, shape index: {}]
  %s1 = inlined_call_operand.vmem [shape: f32[128,128], index: 1, kind: input, shape index: {}]
  %s2 = inlined_call_operand.hbm [shape: f32[128,128], index: 2, kind: input, shape index: {}]
  %s3 = inlined_call_operand.vmem [shape: f32[128,32], index: 3, kind: input, shape index: {}]
  %s4 = inlined_call_operand.hbm [shape: f32[128,128], index: 4, kind: input, shape index: {}]
  %s5 = inlined_call_operand.vmem [shape: f32[128,32], index: 5, kind: output, shape index: {0}]
  %s6 = inlined_call_operand.hbm [shape: f32[128,128], index: 6, kind: output, shape index: {1}]
  %7 = xla_tuple %s5, %s6
  %s8 = sld [smem:[#allocation0]]
  $region46: #{tpu_custom_call.1} parent=0
    _
  %s10 = ssub.s32 1, %s8
  %s11 = scalar_select 0, %s10, %s8
  %12 = sst [smem:[#allocation2]] %s0
  $region1: #{tpu_custom_call.1} parent=0
    #allocation3 [shape = 'u8[65536]{0}', space=vmem, size = 0x10000, scoped, tag = 'input window, operand 2, single buffered']
    #allocation4 [shape = 's32[1]{0}', space=sflag, size = 0x4, scoped, tag = 'scoped memory for tpu_custom_call.1']
    #allocation5 [shape = 's32[1]{0}', space=sflag, size = 0x4, scoped, tag = 'scoped memory for tpu_custom_call.1']
    #allocation6 [shape = 'u8[65536]{0}', space=vmem, size = 0x10000, scoped, tag = 'input window, operand 4, single buffered']
    #allocation7 [shape = 's32[1]{0}', space=sflag, size = 0x4, scoped, tag = 'scoped memory for tpu_custom_call.1']
    #allocation8 [shape = 'u8[65536]{0}', space=vmem, size = 0x10000, scoped, tag = 'output window, operand 1, single buffered']
    %13 = vsyncpa [#allocation4], 0
    %14 = vsyncpa [#allocation7], 0
    %15 = vsyncpa [#allocation5], 0
    // Predicated region
    $region2: #{tpu_custom_call.1} parent=1 // pred_check
      _
    $region3: #{tpu_custom_call.1} parent=1 // pred_check_branch
      %17 = sbr.rel (0) target = $region5
    $region4: #{tpu_custom_call.1} parent=1 // pred_region
      _
    $region5: #{tpu_custom_call.1} parent=1 // pred_fallthru
      _
    // Predicated region
    $region6: #{tpu_custom_call.1} parent=1 // pred_check
      _
    $region7: #{tpu_custom_call.1} parent=1 // pred_check_branch
      %19 = sbr.rel (0) target = $region9
    $region8: #{tpu_custom_call.1} parent=1 // pred_region
      _
    $region9: #{tpu_custom_call.1} parent=1 // pred_fallthru
      _
    // Predicated region
    $region10: #{tpu_custom_call.1} parent=1 // pred_check
      _
    $region11: #{tpu_custom_call.1} parent=1 // pred_check_branch
      %21 = sbr.rel (0) target = $region13
    $region12: #{tpu_custom_call.1} parent=1 // pred_region
      %s23 = ssub.s32 2048, 2048
      %24 = vsyncadd [#allocation4], %s23
      %s25 = sshll.u32 [#allocation3], 4
      %s26 = int_to_ptr.vmem [resolvable:$true] %s25
      %31 = dma.hbm_to_vmem [thread:$0]  %s2, 2048, %s26, [#allocation4], 128, 128, 8
    $region13: #{tpu_custom_call.1} parent=1 // pred_fallthru
      _
    // Predicated region
    $region14: #{tpu_custom_call.1} parent=1 // pred_check
      _
    $region15: #{tpu_custom_call.1} parent=1 // pred_check_branch
      %33 = sbr.rel (0) target = $region17
    $region16: #{tpu_custom_call.1} parent=1 // pred_region
      _
    $region17: #{tpu_custom_call.1} parent=1 // pred_fallthru
      _
    // Predicated region
    $region18: #{tpu_custom_call.1} parent=1 // pred_check
      _
    $region19: #{tpu_custom_call.1} parent=1 // pred_check_branch
      %35 = sbr.rel (0) target = $region21
    $region20: #{tpu_custom_call.1} parent=1 // pred_region
      %s37 = ssub.s32 2048, 2048
      %38 = vsyncadd [#allocation7], %s37
      %s39 = sshll.u32 [#allocation6], 4
      %s40 = int_to_ptr.vmem [resolvable:$true] %s39
      %45 = dma.hbm_to_vmem [thread:$0]  %s4, 2048, %s40, [#allocation7], 128, 128, 8
    $region21: #{tpu_custom_call.1} parent=1 // pred_fallthru
      _
    // Predicated region
    $region22: #{tpu_custom_call.1} parent=1 // pred_check
      _
    $region23: #{tpu_custom_call.1} parent=1 // pred_check_branch
      %47 = sbr.rel (0) target = $region25
    $region24: #{tpu_custom_call.1} parent=1 // pred_region
      %48 = dma.done [#allocation4], 2048
    $region25: #{tpu_custom_call.1} parent=1 // pred_fallthru
      _
    // Predicated region
    $region26: #{tpu_custom_call.1} parent=1 // pred_check
      _
    $region27: #{tpu_custom_call.1} parent=1 // pred_check_branch
      %50 = sbr.rel (0) target = $region29
    $region28: #{tpu_custom_call.1} parent=1 // pred_region
      %51 = dma.done [#allocation7], 2048
    $region29: #{tpu_custom_call.1} parent=1 // pred_fallthru
      _
    %v52 = vld [vmem:[%s1] sm:$0xff]
    %v53 = vld [vmem:[%s1 + $0x8] sm:$0xff]
    %v54 = vld [vmem:[%s1 + $0x10] sm:$0xff]
    %v55 = vld [vmem:[%s1 + $0x18] sm:$0xff]
    %v56 = vld [vmem:[%s1 + $0x20] sm:$0xff]
    %v57 = vld [vmem:[%s1 + $0x28] sm:$0xff]
    %v58 = vld [vmem:[%s1 + $0x30] sm:$0xff]
    %v59 = vld [vmem:[%s1 + $0x38] sm:$0xff]
    %v60 = vld [vmem:[%s1 + $0x40] sm:$0xff]
    %v61 = vld [vmem:[%s1 + $0x48] sm:$0xff]
    %v62 = vld [vmem:[%s1 + $0x50] sm:$0xff]
    %v63 = vld [vmem:[%s1 + $0x58] sm:$0xff]
    %v64 = vld [vmem:[%s1 + $0x60] sm:$0xff]
    %v65 = vld [vmem:[%s1 + $0x68] sm:$0xff]
    %v66 = vld [vmem:[%s1 + $0x70] sm:$0xff]
    %v67 = vld [vmem:[%s1 + $0x78] sm:$0xff]
    %v68 = vld [vmem:[#allocation3] sm:$0xff]
    %v69 = vld [vmem:[#allocation3 + $0x8] sm:$0xff]
    %v70 = vld [vmem:[#allocation3 + $0x10] sm:$0xff]
    %v71 = vld [vmem:[#allocation3 + $0x18] sm:$0xff]
    %v72 = vld [vmem:[#allocation3 + $0x20] sm:$0xff]
    %v73 = vld [vmem:[#allocation3 + $0x28] sm:$0xff]
    %v74 = vld [vmem:[#allocation3 + $0x30] sm:$0xff]
    %v75 = vld [vmem:[#allocation3 + $0x38] sm:$0xff]
    %v76 = vld [vmem:[#allocation3 + $0x40] sm:$0xff]
    %v77 = vld [vmem:[#allocation3 + $0x48] sm:$0xff]
    %v78 = vld [vmem:[#allocation3 + $0x50] sm:$0xff]
    %v79 = vld [vmem:[#allocation3 + $0x58] sm:$0xff]
    %v80 = vld [vmem:[#allocation3 + $0x60] sm:$0xff]
    %v81 = vld [vmem:[#allocation3 + $0x68] sm:$0xff]
    %v82 = vld [vmem:[#allocation3 + $0x70] sm:$0xff]
    %v83 = vld [vmem:[#allocation3 + $0x78] sm:$0xff]
    %84 = vmatprep.subr.mxu0 0.0
    %85 = vmatpush1.msra.mxu0 %v68
    %86 = vmatprep.subr.mxu0 0.0
    %87 = vmatpush1.msra.mxu0 %v69
    %88 = vmatprep.subr.mxu0 0.0
    %89 = vmatpush1.msra.mxu0 %v70
    %90 = vmatprep.subr.mxu0 0.0
    %91 = vmatpush1.msra.mxu0 %v71
    %92 = vmatprep.subr.mxu0 0.0
    %93 = vmatpush1.msra.mxu0 %v72
    %94 = vmatprep.subr.mxu0 0.0
    %95 = vmatpush1.msra.mxu0 %v73
    %96 = vmatprep.subr.mxu0 0.0
    %97 = vmatpush1.msra.mxu0 %v74
    %98 = vmatprep.subr.mxu0 0.0
    %99 = vmatpush1.msra.mxu0 %v75
    %100 = vmatprep.subr.mxu0 0.0
    %101 = vmatpush1.msra.mxu0 %v76
    %102 = vmatprep.subr.mxu0 0.0
    %103 = vmatpush1.msra.mxu0 %v77
    %104 = vmatprep.subr.mxu0 0.0
    %105 = vmatpush1.msra.mxu0 %v78
    %106 = vmatprep.subr.mxu0 0.0
    %107 = vmatpush1.msra.mxu0 %v79
    %108 = vmatprep.subr.mxu0 0.0
    %109 = vmatpush1.msra.mxu0 %v80
    %110 = vmatprep.subr.mxu0 0.0
    %111 = vmatpush1.msra.mxu0 %v81
    %112 = vmatprep.subr.mxu0 0.0
    %113 = vmatpush1.msra.mxu0 %v82
    %114 = vmatprep.subr.mxu0 0.0
    %115 = vmatpush1.msra.mxu0 %v83
    %116 = vmatprep.subr.mxu0 0.0
    %117 = vmatpush1.msra.mxu0 0.0
    %118 = vmatprep.subr.mxu0 0.0
    %119 = vmatpush1.msra.mxu0 0.0
    %120 = vmatprep.subr.mxu0 0.0
    %121 = vmatpush1.msra.mxu0 0.0
    %122 = vmatprep.subr.mxu0 0.0
    %123 = vmatpush1.msra.mxu0 0.0
    %124 = vmatprep.subr.mxu0 0.0
    %125 = vmatpush1.msra.mxu0 0.0
    %126 = vmatprep.subr.mxu0 0.0
    %127 = vmatpush1.msra.mxu0 0.0
    %128 = vmatprep.subr.mxu0 0.0
    %129 = vmatpush1.msra.mxu0 0.0
    %130 = vmatprep.subr.mxu0 0.0
    %131 = vmatpush1.msra.mxu0 0.0
    %132 = vmatprep.subr.mxu0 0.0
    %133 = vmatpush1.msra.mxu0 0.0
    %134 = vmatprep.subr.mxu0 0.0
    %135 = vmatpush1.msra.mxu0 0.0
    %136 = vmatprep.subr.mxu0 0.0
    %137 = vmatpush1.msra.mxu0 0.0
    %138 = vmatprep.subr.mxu0 0.0
    %139 = vmatpush1.msra.mxu0 0.0
    %140 = vmatprep.subr.mxu0 0.0
    %141 = vmatpush1.msra.mxu0 0.0
    %142 = vmatprep.subr.mxu0 0.0
    %143 = vmatpush1.msra.mxu0 0.0
    %144 = vmatprep.subr.mxu0 0.0
    %145 = vmatpush1.msra.mxu0 0.0
    %146 = vmatprep.subr.mxu0 0.0
    %147 = vmatpush1.msra.mxu0 0.0
    %148 = vmatprep.mubr.f32.mxu0 0.0
    %149 = vmatmul.mubr.f32.gmra.mrb[0].mxu0 %v52
    %v150 = vpop.f32.mrb[0].mxu0
    %v151 = vadd.f32 0.0, %v150
    %v152 = vpop.f32.mrb[0].mxu0
    %153 = vmatprep.mubr.f32.mxu0 0.0
    %154 = vmatmul.mubr.f32.gmra.mrb[0].mxu0 %v53
    %v155 = vpop.f32.mrb[0].mxu0
    %v156 = vadd.f32 0.0, %v155
    %v157 = vpop.f32.mrb[0].mxu0
    %158 = vmatprep.mubr.f32.mxu0 0.0
    %159 = vmatmul.mubr.f32.gmra.mrb[0].mxu0 %v54
    %v160 = vpop.f32.mrb[0].mxu0
    %v161 = vadd.f32 0.0, %v160
    %v162 = vpop.f32.mrb[0].mxu0
    %163 = vmatprep.mubr.f32.mxu0 0.0
    %164 = vmatmul.mubr.f32.gmra.mrb[0].mxu0 %v55
    %v165 = vpop.f32.mrb[0].mxu0
    %v166 = vadd.f32 0.0, %v165
    %v167 = vpop.f32.mrb[0].mxu0
    %168 = vmatprep.mubr.f32.mxu0 0.0
    %169 = vmatmul.mubr.f32.gmra.mrb[0].mxu0 %v56
    %v170 = vpop.f32.mrb[0].mxu0
    %v171 = vadd.f32 0.0, %v170
    %v172 = vpop.f32.mrb[0].mxu0
    %173 = vmatprep.mubr.f32.mxu0 0.0
    %174 = vmatmul.mubr.f32.gmra.mrb[0].mxu0 %v57
    %v175 = vpop.f32.mrb[0].mxu0
    %v176 = vadd.f32 0.0, %v175
    %v177 = vpop.f32.mrb[0].mxu0
    %178 = vmatprep.mubr.f32.mxu0 0.0
    %179 = vmatmul.mubr.f32.gmra.mrb[0].mxu0 %v58
    %v180 = vpop.f32.mrb[0].mxu0
    %v181 = vadd.f32 0.0, %v180
    %v182 = vpop.f32.mrb[0].mxu0
    %183 = vmatprep.mubr.f32.mxu0 0.0
    %184 = vmatmul.mubr.f32.gmra.mrb[0].mxu0 %v59
    %v185 = vpop.f32.mrb[0].mxu0
    %v186 = vadd.f32 0.0, %v185
    %v187 = vpop.f32.mrb[0].mxu0
    %188 = vmatprep.mubr.f32.mxu0 0.0
    %189 = vmatmul.mubr.f32.gmra.mrb[0].mxu0 %v60
    %v190 = vpop.f32.mrb[0].mxu0
    %v191 = vadd.f32 0.0, %v190
    %v192 = vpop.f32.mrb[0].mxu0
    %193 = vmatprep.mubr.f32.mxu0 0.0
    %194 = vmatmul.mubr.f32.gmra.mrb[0].mxu0 %v61
    %v195 = vpop.f32.mrb[0].mxu0
    %v196 = vadd.f32 0.0, %v195
    %v197 = vpop.f32.mrb[0].mxu0
    %198 = vmatprep.mubr.f32.mxu0 0.0
    %199 = vmatmul.mubr.f32.gmra.mrb[0].mxu0 %v62
    %v200 = vpop.f32.mrb[0].mxu0
    %v201 = vadd.f32 0.0, %v200
    %v202 = vpop.f32.mrb[0].mxu0
    %203 = vmatprep.mubr.f32.mxu0 0.0
    %204 = vmatmul.mubr.f32.gmra.mrb[0].mxu0 %v63
    %v205 = vpop.f32.mrb[0].mxu0
    %v206 = vadd.f32 0.0, %v205
    %v207 = vpop.f32.mrb[0].mxu0
    %208 = vmatprep.mubr.f32.mxu0 0.0
    %209 = vmatmul.mubr.f32.gmra.mrb[0].mxu0 %v64
    %v210 = vpop.f32.mrb[0].mxu0
    %v211 = vadd.f32 0.0, %v210
    %v212 = vpop.f32.mrb[0].mxu0
    %213 = vmatprep.mubr.f32.mxu0 0.0
    %214 = vmatmul.mubr.f32.gmra.mrb[0].mxu0 %v65
    %v215 = vpop.f32.mrb[0].mxu0
    %v216 = vadd.f32 0.0, %v215
    %v217 = vpop.f32.mrb[0].mxu0
    %218 = vmatprep.mubr.f32.mxu0 0.0
    %219 = vmatmul.mubr.f32.gmra.mrb[0].mxu0 %v66
    %v220 = vpop.f32.mrb[0].mxu0
    %v221 = vadd.f32 0.0, %v220
    %v222 = vpop.f32.mrb[0].mxu0
    %223 = vmatprep.mubr.f32.mxu0 0.0
    %224 = vmatmul.mubr.f32.gmra.mrb[0].mxu0 %v67
    %v225 = vpop.f32.mrb[0].mxu0
    %v226 = vadd.f32 0.0, %v225
    %v227 = vpop.f32.mrb[0].mxu0
    %228 = vdwg.mxu0
    %v229 = vlaneseq
    %v230 = vand.u32 %v229, 127
    %231 = vmax.xlane.f32.xlu0 %v151
    %v232 = vpop.xlane.xlu0 %231
    %233 = vmax.xlane.f32.xlu0 %v156
    %v234 = vpop.xlane.xlu0 %233
    %235 = vmax.xlane.f32.xlu0 %v161
    %v236 = vpop.xlane.xlu0 %235
    %237 = vmax.xlane.f32.xlu0 %v166
    %v238 = vpop.xlane.xlu0 %237
    %239 = vmax.xlane.f32.xlu0 %v171
    %v240 = vpop.xlane.xlu0 %239
    %241 = vmax.xlane.f32.xlu0 %v176
    %v242 = vpop.xlane.xlu0 %241
    %243 = vmax.xlane.f32.xlu0 %v181
    %v244 = vpop.xlane.xlu0 %243
    %245 = vmax.xlane.f32.xlu0 %v186
    %v246 = vpop.xlane.xlu0 %245
    %247 = vmax.xlane.f32.xlu0 %v191
    %v248 = vpop.xlane.xlu0 %247
    %249 = vmax.xlane.f32.xlu0 %v196
    %v250 = vpop.xlane.xlu0 %249
    %251 = vmax.xlane.f32.xlu0 %v201
    %v252 = vpop.xlane.xlu0 %251
    %253 = vmax.xlane.f32.xlu0 %v206
    %v254 = vpop.xlane.xlu0 %253
    %255 = vmax.xlane.f32.xlu0 %v211
    %v256 = vpop.xlane.xlu0 %255
    %257 = vmax.xlane.f32.xlu0 %v216
    %v258 = vpop.xlane.xlu0 %257
    %259 = vmax.xlane.f32.xlu0 %v221
    %v260 = vpop.xlane.xlu0 %259
    %261 = vmax.xlane.f32.xlu0 %v226
    %v262 = vpop.xlane.xlu0 %261
    %v263 = vsub.f32 %v151, %v232
    %v264 = vsub.f32 %v156, %v234
    %v265 = vsub.f32 %v161, %v236
    %v266 = vsub.f32 %v166, %v238
    %v267 = vsub.f32 %v171, %v240
    %v268 = vsub.f32 %v176, %v242
    %v269 = vsub.f32 %v181, %v244
    %v270 = vsub.f32 %v186, %v246
    %v271 = vsub.f32 %v191, %v248
    %v272 = vsub.f32 %v196, %v250
    %v273 = vsub.f32 %v201, %v252
    %v274 = vsub.f32 %v206, %v254
    %v275 = vsub.f32 %v211, %v256
    %v276 = vsub.f32 %v216, %v258
    %v277 = vsub.f32 %v221, %v260
    %v278 = vsub.f32 %v226, %v262
    %v279 = vmul.f32 %v263, 1.442695
    %v280 = vpow.pop %v279
    %v281 = vmul.f32 %v264, 1.442695
    %v282 = vpow.pop %v281
    %v283 = vmul.f32 %v265, 1.442695
    %v284 = vpow.pop %v283
    %v285 = vmul.f32 %v266, 1.442695
    %v286 = vpow.pop %v285
    %v287 = vmul.f32 %v267, 1.442695
    %v288 = vpow.pop %v287
    %v289 = vmul.f32 %v268, 1.442695
    %v290 = vpow.pop %v289
    %v291 = vmul.f32 %v269, 1.442695
    %v292 = vpow.pop %v291
    %v293 = vmul.f32 %v270, 1.442695
    %v294 = vpow.pop %v293
    %v295 = vmul.f32 %v271, 1.442695
    %v296 = vpow.pop %v295
    %v297 = vmul.f32 %v272, 1.442695
    %v298 = vpow.pop %v297
    %v299 = vmul.f32 %v273, 1.442695
    %v300 = vpow.pop %v299
    %v301 = vmul.f32 %v274, 1.442695
    %v302 = vpow.pop %v301
    %v303 = vmul.f32 %v275, 1.442695
    %v304 = vpow.pop %v303
    %v305 = vmul.f32 %v276, 1.442695
    %v306 = vpow.pop %v305
    %v307 = vmul.f32 %v277, 1.442695
    %v308 = vpow.pop %v307
    %v309 = vmul.f32 %v278, 1.442695
    %v310 = vpow.pop %v309
    %311 = vadd.xlane.f32.xlu0 %v280
    %v312 = vpop.xlane.xlu0 %311
    %313 = vadd.xlane.f32.xlu0 %v282
    %v314 = vpop.xlane.xlu0 %313
    %315 = vadd.xlane.f32.xlu0 %v284
    %v316 = vpop.xlane.xlu0 %315
    %317 = vadd.xlane.f32.xlu0 %v286
    %v318 = vpop.xlane.xlu0 %317
    %319 = vadd.xlane.f32.xlu0 %v288
    %v320 = vpop.xlane.xlu0 %319
    %321 = vadd.xlane.f32.xlu0 %v290
    %v322 = vpop.xlane.xlu0 %321
    %323 = vadd.xlane.f32.xlu0 %v292
    %v324 = vpop.xlane.xlu0 %323
    %325 = vadd.xlane.f32.xlu0 %v294
    %v326 = vpop.xlane.xlu0 %325
    %327 = vadd.xlane.f32.xlu0 %v296
    %v328 = vpop.xlane.xlu0 %327
    %329 = vadd.xlane.f32.xlu0 %v298
    %v330 = vpop.xlane.xlu0 %329
    %331 = vadd.xlane.f32.xlu0 %v300
    %v332 = vpop.xlane.xlu0 %331
    %333 = vadd.xlane.f32.xlu0 %v302
    %v334 = vpop.xlane.xlu0 %333
    %335 = vadd.xlane.f32.xlu0 %v304
    %v336 = vpop.xlane.xlu0 %335
    %337 = vadd.xlane.f32.xlu0 %v306
    %v338 = vpop.xlane.xlu0 %337
    %339 = vadd.xlane.f32.xlu0 %v308
    %v340 = vpop.xlane.xlu0 %339
    %341 = vadd.xlane.f32.xlu0 %v310
    %v342 = vpop.xlane.xlu0 %341
    %v343 = vrcp.pop %v312
    %v344 = vrcp.pop %v314
    %v345 = vrcp.pop %v316
    %v346 = vrcp.pop %v318
    %v347 = vrcp.pop %v320
    %v348 = vrcp.pop %v322
    %v349 = vrcp.pop %v324
    %v350 = vrcp.pop %v326
    %v351 = vrcp.pop %v328
    %v352 = vrcp.pop %v330
    %v353 = vrcp.pop %v332
    %v354 = vrcp.pop %v334
    %v355 = vrcp.pop %v336
    %v356 = vrcp.pop %v338
    %v357 = vrcp.pop %v340
    %v358 = vrcp.pop %v342
    %v359 = vmul.f32 %v280, %v343
    %v360 = vmul.f32 %v282, %v344
    %v361 = vmul.f32 %v284, %v345
    %v362 = vmul.f32 %v286, %v346
    %v363 = vmul.f32 %v288, %v347
    %v364 = vmul.f32 %v290, %v348
    %v365 = vmul.f32 %v292, %v349
    %v366 = vmul.f32 %v294, %v350
    %v367 = vmul.f32 %v296, %v351
    %v368 = vmul.f32 %v298, %v352
    %v369 = vmul.f32 %v300, %v353
    %v370 = vmul.f32 %v302, %v354
    %v371 = vmul.f32 %v304, %v355
    %v372 = vmul.f32 %v306, %v356
    %v373 = vmul.f32 %v308, %v357
    %v374 = vmul.f32 %v310, %v358
    %v375 = vlaneseq
    %v376 = vshrl.u32 %v375, 7
    %v377 = vadd.s32 %v376, 8
    %v378 = vadd.s32 %v376, 16
    %v379 = vadd.s32 %v376, 24
    %v380 = vadd.s32 %v376, 32
    %v381 = vadd.s32 %v376, 40
    %v382 = vadd.s32 %v376, 48
    %v383 = vadd.s32 %v376, 56
    %v384 = vadd.s32 %v376, 64
    %v385 = vadd.s32 %v376, 72
    %v386 = vadd.s32 %v376, 80
    %v387 = vadd.s32 %v376, 88
    %v388 = vadd.s32 %v376, 96
    %v389 = vadd.s32 %v376, 104
    %v390 = vadd.s32 %v376, 112
    %v391 = vadd.s32 %v376, 120
    %s392 = smul.u32 0, 128
    %v393 = vstv %s392
    %v394 = vadd.s32 %v376, %v393
    %v395 = vadd.s32 %v377, %v393
    %v396 = vadd.s32 %v378, %v393
    %v397 = vadd.s32 %v379, %v393
    %v398 = vadd.s32 %v380, %v393
    %v399 = vadd.s32 %v381, %v393
    %v400 = vadd.s32 %v382, %v393
    %v401 = vadd.s32 %v383, %v393
    %v402 = vadd.s32 %v384, %v393
    %v403 = vadd.s32 %v385, %v393
    %v404 = vadd.s32 %v386, %v393
    %v405 = vadd.s32 %v387, %v393
    %v406 = vadd.s32 %v388, %v393
    %v407 = vadd.s32 %v389, %v393
    %v408 = vadd.s32 %v390, %v393
    %v409 = vadd.s32 %v391, %v393
    %v410 = vld [vmem:[#allocation6] sm:$0xff]
    %v411 = vld [vmem:[#allocation6 + $0x8] sm:$0xff]
    %v412 = vld [vmem:[#allocation6 + $0x10] sm:$0xff]
    %v413 = vld [vmem:[#allocation6 + $0x18] sm:$0xff]
    %v414 = vld [vmem:[#allocation6 + $0x20] sm:$0xff]
    %v415 = vld [vmem:[#allocation6 + $0x28] sm:$0xff]
    %v416 = vld [vmem:[#allocation6 + $0x30] sm:$0xff]
    %v417 = vld [vmem:[#allocation6 + $0x38] sm:$0xff]
    %v418 = vld [vmem:[#allocation6 + $0x40] sm:$0xff]
    %v419 = vld [vmem:[#allocation6 + $0x48] sm:$0xff]
    %v420 = vld [vmem:[#allocation6 + $0x50] sm:$0xff]
    %v421 = vld [vmem:[#allocation6 + $0x58] sm:$0xff]
    %v422 = vld [vmem:[#allocation6 + $0x60] sm:$0xff]
    %v423 = vld [vmem:[#allocation6 + $0x68] sm:$0xff]
    %v424 = vld [vmem:[#allocation6 + $0x70] sm:$0xff]
    %v425 = vld [vmem:[#allocation6 + $0x78] sm:$0xff]
    %v426 = vmul.f32 %v359, %v410
    %v427 = vmul.f32 %v360, %v411
    %v428 = vmul.f32 %v361, %v412
    %v429 = vmul.f32 %v362, %v413
    %v430 = vmul.f32 %v363, %v414
    %v431 = vmul.f32 %v364, %v415
    %v432 = vmul.f32 %v365, %v416
    %v433 = vmul.f32 %v366, %v417
    %v434 = vmul.f32 %v367, %v418
    %v435 = vmul.f32 %v368, %v419
    %v436 = vmul.f32 %v369, %v420
    %v437 = vmul.f32 %v370, %v421
    %v438 = vmul.f32 %v371, %v422
    %v439 = vmul.f32 %v372, %v423
    %v440 = vmul.f32 %v373, %v424
    %v441 = vmul.f32 %v374, %v425
    %vm442 = vcmp.eq.s32.totalorder %v394, %v230
    %vm443 = vcmp.eq.s32.totalorder %v395, %v230
    %vm444 = vcmp.eq.s32.totalorder %v396, %v230
    %vm445 = vcmp.eq.s32.totalorder %v397, %v230
    %vm446 = vcmp.eq.s32.totalorder %v398, %v230
    %vm447 = vcmp.eq.s32.totalorder %v399, %v230
    %vm448 = vcmp.eq.s32.totalorder %v400, %v230
    %vm449 = vcmp.eq.s32.totalorder %v401, %v230
    %vm450 = vcmp.eq.s32.totalorder %v402, %v230
    %vm451 = vcmp.eq.s32.totalorder %v403, %v230
    %vm452 = vcmp.eq.s32.totalorder %v404, %v230
    %vm453 = vcmp.eq.s32.totalorder %v405, %v230
    %vm454 = vcmp.eq.s32.totalorder %v406, %v230
    %vm455 = vcmp.eq.s32.totalorder %v407, %v230
    %vm456 = vcmp.eq.s32.totalorder %v408, %v230
    %vm457 = vcmp.eq.s32.totalorder %v409, %v230
    %s458 = sld [smem:[#allocation2]]
    %v459 = vstv %s458
    %v460 = vadd.f32 %v426, %v459
    %v461 = vadd.f32 %v427, %v459
    %v462 = vadd.f32 %v428, %v459
    %v463 = vadd.f32 %v429, %v459
    %v464 = vadd.f32 %v430, %v459
    %v465 = vadd.f32 %v431, %v459
    %v466 = vadd.f32 %v432, %v459
    %v467 = vadd.f32 %v433, %v459
    %v468 = vadd.f32 %v434, %v459
    %v469 = vadd.f32 %v435, %v459
    %v470 = vadd.f32 %v436, %v459
    %v471 = vadd.f32 %v437, %v459
    %v472 = vadd.f32 %v438, %v459
    %v473 = vadd.f32 %v439, %v459
    %v474 = vadd.f32 %v440, %v459
    %v475 = vadd.f32 %v441, %v459
    %v476 = vsel %vm442, %v460, %v426
    %v477 = vsel %vm443, %v461, %v427
    %v478 = vsel %vm444, %v462, %v428
    %v479 = vsel %vm445, %v463, %v429
    %v480 = vsel %vm446, %v464, %v430
    %v481 = vsel %vm447, %v465, %v431
    %v482 = vsel %vm448, %v466, %v432
    %v483 = vsel %vm449, %v467, %v433
    %v484 = vsel %vm450, %v468, %v434
    %v485 = vsel %vm451, %v469, %v435
    %v486 = vsel %vm452, %v470, %v436
    %v487 = vsel %vm453, %v471, %v437
    %v488 = vsel %vm454, %v472, %v438
    %v489 = vsel %vm455, %v473, %v439
    %v490 = vsel %vm456, %v474, %v440
    %v491 = vsel %vm457, %v475, %v441
    %492 = vst [vmem:[#allocation8] sm:$0xff] %v476
    %493 = vst [vmem:[#allocation8 + $0x8] sm:$0xff] %v477
    %494 = vst [vmem:[#allocation8 + $0x10] sm:$0xff] %v478
    %495 = vst [vmem:[#allocation8 + $0x18] sm:$0xff] %v479
    %496 = vst [vmem:[#allocation8 + $0x20] sm:$0xff] %v480
    %497 = vst [vmem:[#allocation8 + $0x28] sm:$0xff] %v481
    %498 = vst [vmem:[#allocation8 + $0x30] sm:$0xff] %v482
    %499 = vst [vmem:[#allocation8 + $0x38] sm:$0xff] %v483
    %500 = vst [vmem:[#allocation8 + $0x40] sm:$0xff] %v484
    %501 = vst [vmem:[#allocation8 + $0x48] sm:$0xff] %v485
    %502 = vst [vmem:[#allocation8 + $0x50] sm:$0xff] %v486
    %503 = vst [vmem:[#allocation8 + $0x58] sm:$0xff] %v487
    %504 = vst [vmem:[#allocation8 + $0x60] sm:$0xff] %v488
    %505 = vst [vmem:[#allocation8 + $0x68] sm:$0xff] %v489
    %506 = vst [vmem:[#allocation8 + $0x70] sm:$0xff] %v490
    %507 = vst [vmem:[#allocation8 + $0x78] sm:$0xff] %v491
    %v508 = vld [vmem:[%s3] sm:$0xff]
    %v509 = vld [vmem:[%s3 + $0x8] sm:$0xff]
    %v510 = vld [vmem:[%s3 + $0x10] sm:$0xff]
    %v511 = vld [vmem:[%s3 + $0x18] sm:$0xff]
    %v512 = vld [vmem:[%s3 + $0x20] sm:$0xff]
    %v513 = vld [vmem:[%s3 + $0x28] sm:$0xff]
    %v514 = vld [vmem:[%s3 + $0x30] sm:$0xff]
    %v515 = vld [vmem:[%s3 + $0x38] sm:$0xff]
    %v516 = vld [vmem:[%s3 + $0x40] sm:$0xff]
    %v517 = vld [vmem:[%s3 + $0x48] sm:$0xff]
    %v518 = vld [vmem:[%s3 + $0x50] sm:$0xff]
    %v519 = vld [vmem:[%s3 + $0x58] sm:$0xff]
    %v520 = vld [vmem:[%s3 + $0x60] sm:$0xff]
    %v521 = vld [vmem:[%s3 + $0x68] sm:$0xff]
    %v522 = vld [vmem:[%s3 + $0x70] sm:$0xff]
    %v523 = vld [vmem:[%s3 + $0x78] sm:$0xff]
    %524 = vmatprep.subr.mxu0 0.0
    %525 = vmatpush1.msra.mxu0 %v508
    %526 = vmatprep.subr.mxu0 0.0
    %527 = vmatpush1.msra.mxu0 %v509
    %528 = vmatprep.subr.mxu0 0.0
    %529 = vmatpush1.msra.mxu0 %v510
    %530 = vmatprep.subr.mxu0 0.0
    %531 = vmatpush1.msra.mxu0 %v511
    %532 = vmatprep.subr.mxu0 0.0
    %533 = vmatpush1.msra.mxu0 %v512
    %534 = vmatprep.subr.mxu0 0.0
    %535 = vmatpush1.msra.mxu0 %v513
    %536 = vmatprep.subr.mxu0 0.0
    %537 = vmatpush1.msra.mxu0 %v514
    %538 = vmatprep.subr.mxu0 0.0
    %539 = vmatpush1.msra.mxu0 %v515
    %540 = vmatprep.subr.mxu0 0.0
    %541 = vmatpush1.msra.mxu0 %v516
    %542 = vmatprep.subr.mxu0 0.0
    %543 = vmatpush1.msra.mxu0 %v517
    %544 = vmatprep.subr.mxu0 0.0
    %545 = vmatpush1.msra.mxu0 %v518
    %546 = vmatprep.subr.mxu0 0.0
    %547 = vmatpush1.msra.mxu0 %v519
    %548 = vmatprep.subr.mxu0 0.0
    %549 = vmatpush1.msra.mxu0 %v520
    %550 = vmatprep.subr.mxu0 0.0
    %551 = vmatpush1.msra.mxu0 %v521
    %552 = vmatprep.subr.mxu0 0.0
    %553 = vmatpush1.msra.mxu0 %v522
    %554 = vmatprep.subr.mxu0 0.0
    %555 = vmatpush1.msra.mxu0 %v523
    %556 = vmatprep.subr.mxu0 0.0
    %557 = vmatpush1.msra.mxu0 0.0
    %558 = vmatprep.subr.mxu0 0.0
    %559 = vmatpush1.msra.mxu0 0.0
    %560 = vmatprep.subr.mxu0 0.0
    %561 = vmatpush1.msra.mxu0 0.0
    %562 = vmatprep.subr.mxu0 0.0
    %563 = vmatpush1.msra.mxu0 0.0
    %564 = vmatprep.subr.mxu0 0.0
    %565 = vmatpush1.msra.mxu0 0.0
    %566 = vmatprep.subr.mxu0 0.0
    %567 = vmatpush1.msra.mxu0 0.0
    %568 = vmatprep.subr.mxu0 0.0
    %569 = vmatpush1.msra.mxu0 0.0
    %570 = vmatprep.subr.mxu0 0.0
    %571 = vmatpush1.msra.mxu0 0.0
    %572 = vmatprep.subr.mxu0 0.0
    %573 = vmatpush1.msra.mxu0 0.0
    %574 = vmatprep.subr.mxu0 0.0
    %575 = vmatpush1.msra.mxu0 0.0
    %576 = vmatprep.subr.mxu0 0.0
    %577 = vmatpush1.msra.mxu0 0.0
    %578 = vmatprep.subr.mxu0 0.0
    %579 = vmatpush1.msra.mxu0 0.0
    %580 = vmatprep.subr.mxu0 0.0
    %581 = vmatpush1.msra.mxu0 0.0
    %582 = vmatprep.subr.mxu0 0.0
    %583 = vmatpush1.msra.mxu0 0.0
    %584 = vmatprep.subr.mxu0 0.0
    %585 = vmatpush1.msra.mxu0 0.0
    %586 = vmatprep.subr.mxu0 0.0
    %587 = vmatpush1.msra.mxu0 0.0
    %588 = vmatprep.mubr.f32.mxu0 0.0
    %589 = vmatmul.mubr.f32.gmra.mrb[0].mxu0 %v359
    %v590 = vpop.f32.mrb[0].mxu0
    %v591 = vadd.f32 0.0, %v590
    %v592 = vpop.f32.mrb[0].mxu0
    %593 = vmatprep.mubr.f32.mxu0 0.0
    %594 = vmatmul.mubr.f32.gmra.mrb[0].mxu0 %v360
    %v595 = vpop.f32.mrb[0].mxu0
    %v596 = vadd.f32 0.0, %v595
    %v597 = vpop.f32.mrb[0].mxu0
    %598 = vmatprep.mubr.f32.mxu0 0.0
    %599 = vmatmul.mubr.f32.gmra.mrb[0].mxu0 %v361
    %v600 = vpop.f32.mrb[0].mxu0
    %v601 = vadd.f32 0.0, %v600
    %v602 = vpop.f32.mrb[0].mxu0
    %603 = vmatprep.mubr.f32.mxu0 0.0
    %604 = vmatmul.mubr.f32.gmra.mrb[0].mxu0 %v362
    %v605 = vpop.f32.mrb[0].mxu0
    %v606 = vadd.f32 0.0, %v605
    %v607 = vpop.f32.mrb[0].mxu0
    %608 = vmatprep.mubr.f32.mxu0 0.0
    %609 = vmatmul.mubr.f32.gmra.mrb[0].mxu0 %v363
    %v610 = vpop.f32.mrb[0].mxu0
    %v611 = vadd.f32 0.0, %v610
    %v612 = vpop.f32.mrb[0].mxu0
    %613 = vmatprep.mubr.f32.mxu0 0.0
    %614 = vmatmul.mubr.f32.gmra.mrb[0].mxu0 %v364
    %v615 = vpop.f32.mrb[0].mxu0
    %v616 = vadd.f32 0.0, %v615
    %v617 = vpop.f32.mrb[0].mxu0
    %618 = vmatprep.mubr.f32.mxu0 0.0
    %619 = vmatmul.mubr.f32.gmra.mrb[0].mxu0 %v365
    %v620 = vpop.f32.mrb[0].mxu0
    %v621 = vadd.f32 0.0, %v620
    %v622 = vpop.f32.mrb[0].mxu0
    %623 = vmatprep.mubr.f32.mxu0 0.0
    %624 = vmatmul.mubr.f32.gmra.mrb[0].mxu0 %v366
    %v625 = vpop.f32.mrb[0].mxu0
    %v626 = vadd.f32 0.0, %v625
    %v627 = vpop.f32.mrb[0].mxu0
    %628 = vmatprep.mubr.f32.mxu0 0.0
    %629 = vmatmul.mubr.f32.gmra.mrb[0].mxu0 %v367
    %v630 = vpop.f32.mrb[0].mxu0
    %v631 = vadd.f32 0.0, %v630
    %v632 = vpop.f32.mrb[0].mxu0
    %633 = vmatprep.mubr.f32.mxu0 0.0
    %634 = vmatmul.mubr.f32.gmra.mrb[0].mxu0 %v368
    %v635 = vpop.f32.mrb[0].mxu0
    %v636 = vadd.f32 0.0, %v635
    %v637 = vpop.f32.mrb[0].mxu0
    %638 = vmatprep.mubr.f32.mxu0 0.0
    %639 = vmatmul.mubr.f32.gmra.mrb[0].mxu0 %v369
    %v640 = vpop.f32.mrb[0].mxu0
    %v641 = vadd.f32 0.0, %v640
    %v642 = vpop.f32.mrb[0].mxu0
    %643 = vmatprep.mubr.f32.mxu0 0.0
    %644 = vmatmul.mubr.f32.gmra.mrb[0].mxu0 %v370
    %v645 = vpop.f32.mrb[0].mxu0
    %v646 = vadd.f32 0.0, %v645
    %v647 = vpop.f32.mrb[0].mxu0
    %648 = vmatprep.mubr.f32.mxu0 0.0
    %649 = vmatmul.mubr.f32.gmra.mrb[0].mxu0 %v371
    %v650 = vpop.f32.mrb[0].mxu0
    %v651 = vadd.f32 0.0, %v650
    %v652 = vpop.f32.mrb[0].mxu0
    %653 = vmatprep.mubr.f32.mxu0 0.0
    %654 = vmatmul.mubr.f32.gmra.mrb[0].mxu0 %v372
    %v655 = vpop.f32.mrb[0].mxu0
    %v656 = vadd.f32 0.0, %v655
    %v657 = vpop.f32.mrb[0].mxu0
    %658 = vmatprep.mubr.f32.mxu0 0.0
    %659 = vmatmul.mubr.f32.gmra.mrb[0].mxu0 %v373
    %v660 = vpop.f32.mrb[0].mxu0
    %v661 = vadd.f32 0.0, %v660
    %v662 = vpop.f32.mrb[0].mxu0
    %663 = vmatprep.mubr.f32.mxu0 0.0
    %664 = vmatmul.mubr.f32.gmra.mrb[0].mxu0 %v374
    %v665 = vpop.f32.mrb[0].mxu0
    %v666 = vadd.f32 0.0, %v665
    %v667 = vpop.f32.mrb[0].mxu0
    %668 = vdwg.mxu0
    %vm669 = vcmp.gt.f32.partialorder %v591, 0.0
    %vm670 = vcmp.gt.f32.partialorder %v596, 0.0
    %vm671 = vcmp.gt.f32.partialorder %v601, 0.0
    %vm672 = vcmp.gt.f32.partialorder %v606, 0.0
    %vm673 = vcmp.gt.f32.partialorder %v611, 0.0
    %vm674 = vcmp.gt.f32.partialorder %v616, 0.0
    %vm675 = vcmp.gt.f32.partialorder %v621, 0.0
    %vm676 = vcmp.gt.f32.partialorder %v626, 0.0
    %vm677 = vcmp.gt.f32.partialorder %v631, 0.0
    %vm678 = vcmp.gt.f32.partialorder %v636, 0.0
    %vm679 = vcmp.gt.f32.partialorder %v641, 0.0
    %vm680 = vcmp.gt.f32.partialorder %v646, 0.0
    %vm681 = vcmp.gt.f32.partialorder %v651, 0.0
    %vm682 = vcmp.gt.f32.partialorder %v656, 0.0
    %vm683 = vcmp.gt.f32.partialorder %v661, 0.0
    %vm684 = vcmp.gt.f32.partialorder %v666, 0.0
    %v685 = vmul.f32 %v591, 0.01
    %v686 = vmul.f32 %v596, 0.01
    %v687 = vmul.f32 %v601, 0.01
    %v688 = vmul.f32 %v606, 0.01
    %v689 = vmul.f32 %v611, 0.01
    %v690 = vmul.f32 %v616, 0.01
    %v691 = vmul.f32 %v621, 0.01
    %v692 = vmul.f32 %v626, 0.01
    %v693 = vmul.f32 %v631, 0.01
    %v694 = vmul.f32 %v636, 0.01
    %v695 = vmul.f32 %v641, 0.01
    %v696 = vmul.f32 %v646, 0.01
    %v697 = vmul.f32 %v651, 0.01
    %v698 = vmul.f32 %v656, 0.01
    %v699 = vmul.f32 %v661, 0.01
    %v700 = vmul.f32 %v666, 0.01
    %v701 = vsel %vm669, %v591, %v685
    %v702 = vsel %vm670, %v596, %v686
    %v703 = vsel %vm671, %v601, %v687
    %v704 = vsel %vm672, %v606, %v688
    %v705 = vsel %vm673, %v611, %v689
    %v706 = vsel %vm674, %v616, %v690
    %v707 = vsel %vm675, %v621, %v691
    %v708 = vsel %vm676, %v626, %v692
    %v709 = vsel %vm677, %v631, %v693
    %v710 = vsel %vm678, %v636, %v694
    %v711 = vsel %vm679, %v641, %v695
    %v712 = vsel %vm680, %v646, %v696
    %v713 = vsel %vm681, %v651, %v697
    %v714 = vsel %vm682, %v656, %v698
    %v715 = vsel %vm683, %v661, %v699
    %v716 = vsel %vm684, %v666, %v700
    %vm717 = vcmask 261120
    %718 = vst.msk [vmem:[%s5] sm:$0xff] %vm717, %v701
    %719 = vst.msk [vmem:[%s5 + $0x8] sm:$0xff] %vm717, %v702
    %720 = vst.msk [vmem:[%s5 + $0x10] sm:$0xff] %vm717, %v703
    %721 = vst.msk [vmem:[%s5 + $0x18] sm:$0xff] %vm717, %v704
    %722 = vst.msk [vmem:[%s5 + $0x20] sm:$0xff] %vm717, %v705
    %723 = vst.msk [vmem:[%s5 + $0x28] sm:$0xff] %vm717, %v706
    %724 = vst.msk [vmem:[%s5 + $0x30] sm:$0xff] %vm717, %v707
    %725 = vst.msk [vmem:[%s5 + $0x38] sm:$0xff] %vm717, %v708
    %726 = vst.msk [vmem:[%s5 + $0x40] sm:$0xff] %vm717, %v709
    %727 = vst.msk [vmem:[%s5 + $0x48] sm:$0xff] %vm717, %v710
    %728 = vst.msk [vmem:[%s5 + $0x50] sm:$0xff] %vm717, %v711
    %729 = vst.msk [vmem:[%s5 + $0x58] sm:$0xff] %vm717, %v712
    %730 = vst.msk [vmem:[%s5 + $0x60] sm:$0xff] %vm717, %v713
    %731 = vst.msk [vmem:[%s5 + $0x68] sm:$0xff] %vm717, %v714
    %732 = vst.msk [vmem:[%s5 + $0x70] sm:$0xff] %vm717, %v715
    %733 = vst.msk [vmem:[%s5 + $0x78] sm:$0xff] %vm717, %v716
    // Predicated region
    $region30: #{tpu_custom_call.1} parent=1 // pred_check
      _
    $region31: #{tpu_custom_call.1} parent=1 // pred_check_branch
      %735 = sbr.rel (0) target = $region33
    $region32: #{tpu_custom_call.1} parent=1 // pred_region
      _
    $region33: #{tpu_custom_call.1} parent=1 // pred_fallthru
      _
    // Predicated region
    $region34: #{tpu_custom_call.1} parent=1 // pred_check
      _
    $region35: #{tpu_custom_call.1} parent=1 // pred_check_branch
      %737 = sbr.rel (0) target = $region37
    $region36: #{tpu_custom_call.1} parent=1 // pred_region
      %s739 = ssub.s32 2048, 2048
      %740 = vsyncadd [#allocation5], %s739
      %s741 = sshll.u32 [#allocation8], 4
      %s742 = int_to_ptr.vmem [resolvable:$true] %s741
      %747 = dma.vmem_to_hbm [thread:$0]  %s742, 2048, %s6, [#allocation5], 128, 128, 8
    $region37: #{tpu_custom_call.1} parent=1 // pred_fallthru
      _
    // Predicated region
    $region38: #{tpu_custom_call.1} parent=1 // pred_check
      _
    $region39: #{tpu_custom_call.1} parent=1 // pred_check_branch
      %749 = sbr.rel (0) target = $region41
    $region40: #{tpu_custom_call.1} parent=1 // pred_region
      _
    $region41: #{tpu_custom_call.1} parent=1 // pred_fallthru
      _
    // Predicated region
    $region42: #{tpu_custom_call.1} parent=1 // pred_check
      _
    $region43: #{tpu_custom_call.1} parent=1 // pred_check_branch
      %751 = sbr.rel (0) target = $region45
    $region44: #{tpu_custom_call.1} parent=1 // pred_region
      %752 = dma.done [#allocation5], 2048
    $region45: #{tpu_custom_call.1} parent=1 // pred_fallthru
      _
    %753 = vsyncpa [#allocation4], 1
    %754 = vsyncpa [#allocation7], 1
    %755 = vsyncpa [#allocation5], 1

</llo_original>
